<compile_context>
chip_gen: v5e
topology: v5e:2x2
jax: 0.10.0
libtpu: 0.0.40
codegen_flags: <defaults>
</compile_context>

<pallas_src>
import jax
import jax.numpy as jnp
from jax import lax
from jax.experimental import pallas as pl
from jax.experimental.pallas import tpu as pltpu

SQRT2 = 2.0 ** 0.5


def _round_up(n, m):
    return ((n + m - 1) // m) * m


def _cdiv(a, b):
    return -(-a // b)


def _vmem_budget_bytes():
    """Per-chip VMEM cap with headroom for Mosaic internal scratch / spill."""
    try:
        phys = int(pltpu.get_tpu_info().vmem_capacity_bytes)
    except Exception:
        phys = 64 << 20  # conservative default: v7x per-TensorCore VMEM
    headroom = max(phys // 8, 8 << 20)  # v7x: 64->56 MiB usable; v5e/v6e: 128->112 MiB usable
    return max(phys - headroom, 16 << 20)


def _fused_kernel(x_ref, w_ref, b_ref, out_ref):
    """One grid step == one batch tile; whole layer stack is VMEM resident.

    x_ref:   (TB, Fp)
    w_ref:   (L, Fp, Fp)  full weight stack, w_ref[l] = W_l^T, single-buffered / resident
    b_ref:   (L, 1, Fp)   full bias stack, single-buffered / resident
    out_ref: (TB, Fp)
    """
    num_layers = w_ref.shape[0]
    pos = jnp.float32(SQRT2)
    neg = jnp.float32(0.2 * SQRT2)

    def body(l, h):
        # Cast activations to the weight dtype (bf16 weights -> native bf16 MXU passes),
        # accumulate in f32 on the MXU.
        h = jnp.dot(h.astype(w_ref.dtype), w_ref[l], preferred_element_type=jnp.float32)
        h = h + b_ref[l].astype(jnp.float32)
        # LeakyReLU(0.2) followed by * sqrt(2), folded into one multiply.
        return h * jnp.where(h >= 0.0, pos, neg)

    # fori_loop (not an unrolled Python loop) bounds the live range of h / MXU scratch.
    h = lax.fori_loop(0, num_layers, body, x_ref[...].astype(jnp.float32))
    out_ref[...] = h.astype(out_ref.dtype)


def _streaming_kernel(x_ref, w_ref, b_ref, out_ref, h_ref):
    """Fallback for weight stacks that do not fit resident: grid = (batch_tiles, L).

    Weights stream one layer per grid step (layer axis "arbitrary"); the running activation
    is carried in a VMEM scratch accumulator.
    x_ref: (TB, Fp); w_ref: (1, Fp, Fp); b_ref: (1, 1, Fp); out_ref: (TB, Fp); h_ref: (TB, Fp) f32
    """
    l = pl.program_id(1)
    pos = jnp.float32(SQRT2)
    neg = jnp.float32(0.2 * SQRT2)

    @pl.when(l == 0)
    def _():
        h_ref[...] = x_ref[...].astype(jnp.float32)

    h = jnp.dot(h_ref[...].astype(w_ref.dtype), w_ref[0],
                preferred_element_type=jnp.float32)
    h = h + b_ref[0].astype(jnp.float32)
    h_ref[...] = h * jnp.where(h >= 0.0, pos, neg)

    @pl.when(l == pl.num_programs(1) - 1)
    def _():
        out_ref[...] = h_ref[...].astype(out_ref.dtype)


def style_mapper(x, w_stack, b_stack, *, force_stream=False):
    """StyleMapper forward.

    x:       (B, F)
    w_stack: (L, F, F) with w_stack[l] = W_l^T, i.e. (in, out) layout — already transposed
             from PyTorch nn.Linear's (out, in). May be float32 or bfloat16.
    b_stack: (L, F)
    """
    B, F = x.shape
    L, f_in, f_out = w_stack.shape
    if not (f_in == F and f_out == F and b_stack.shape == (L, F)):
        raise ValueError("w_stack must be (L, F, F) in (in, out) layout and b_stack must be (L, F)")

    # Lane-dense feature dim (multiple of 128); zero padding is exact for Linear+LeakyReLU chains.
    Fp = _round_up(F, 128)
    w_item = jnp.dtype(w_stack.dtype).itemsize
    b_item = jnp.dtype(b_stack.dtype).itemsize
    x_item = jnp.dtype(x.dtype).itemsize

    cap = _vmem_budget_bytes()

    # Batch tile: multiple of 8 sublanes; target >=4 tiles when B allows so the "parallel" batch
    # axis spans both TensorCores (v7x) and the x/out DMA pipeline has steps to overlap.
    TB = max(8, min(512, _round_up(_cdiv(B, 4), 8)))

    # Resident-path footprint: single-buffered W/b stacks, double-buffered activation tiles,
    # plus f32 intermediates / MXU scratch and fixed headroom.
    fused_need = (L * Fp * Fp * w_item + L * Fp * b_item
                  + 2 * TB * Fp * x_item + 2 * TB * Fp * x_item
                  + 3 * TB * Fp * 4 + (2 << 20))

    stream = force_stream or fused_need > cap
    if stream:
        # Weights re-stream per batch tile -> favor fewer, larger batch tiles.
        TB = max(8, min(1024, _round_up(_cdiv(B, 2), 8)))

    Bp = _round_up(B, TB)

    x_p = jnp.zeros((Bp, Fp), x.dtype).at[:B, :F].set(x)
    w_p = jnp.zeros((L, Fp, Fp), w_stack.dtype).at[:, :F, :F].set(w_stack)
    b_p = jnp.zeros((L, 1, Fp), b_stack.dtype).at[:, 0, :F].set(b_stack)

    if not stream:
        vmem_limit = int(min(max(fused_need, 16 << 20), cap))
        grid_spec = pltpu.PrefetchScalarGridSpec(
            num_scalar_prefetch=0,
            grid=(Bp // TB,),
            in_specs=[
                pl.BlockSpec((TB, Fp), lambda i: (i, 0)),            # activation batch tile
                # Constant index_map -> fetched once; single-buffered to halve resident VMEM.
                pl.BlockSpec((L, Fp, Fp), lambda i: (0, 0, 0),
                             pipeline_mode=pl.Buffered(1)),
                pl.BlockSpec((L, 1, Fp), lambda i: (0, 0, 0),
                             pipeline_mode=pl.Buffered(1)),
            ],
            out_specs=pl.BlockSpec((TB, Fp), lambda i: (i, 0)),
        )
        kernel = _fused_kernel
        dims = ("parallel",)
    else:
        stream_need = (2 * Fp * Fp * w_item + 2 * Fp * b_item
                       + 2 * TB * Fp * x_item + 2 * TB * Fp * x_item
                       + 3 * TB * Fp * 4 + (2 << 20))
        vmem_limit = int(min(max(stream_need, 16 << 20), cap))
        grid_spec = pltpu.PrefetchScalarGridSpec(
            num_scalar_prefetch=0,
            grid=(Bp // TB, L),
            in_specs=[
                pl.BlockSpec((TB, Fp), lambda i, l: (i, 0)),
                pl.BlockSpec((1, Fp, Fp), lambda i, l: (l, 0, 0)),   # one layer's weights per step
                pl.BlockSpec((1, 1, Fp), lambda i, l: (l, 0, 0)),
            ],
            out_specs=pl.BlockSpec((TB, Fp), lambda i, l: (i, 0)),
            scratch_shapes=[pltpu.VMEM((TB, Fp), jnp.float32)],      # running activation
        )
        kernel = _streaming_kernel
        dims = ("parallel", "arbitrary")

    out_p = pl.pallas_call(
        kernel,
        out_shape=jax.ShapeDtypeStruct((Bp, Fp), x.dtype),
        grid_spec=grid_spec,
        compiler_params=pltpu.CompilerParams(
            dimension_semantics=dims,
            vmem_limit_bytes=vmem_limit,
        ),
    )(x_p, w_p, b_p)

    return out_p[:B, :F]


def reference_style_mapper(x, w_stack, b_stack):
    """Pure-JAX reference mirroring the PyTorch forward (matches kernel matmul precision)."""
    h = x.astype(jnp.float32)
    for l in range(w_stack.shape[0]):
        h = jnp.dot(h.astype(w_stack.dtype), w_stack[l],
                    preferred_element_type=jnp.float32)
        h = h + b_stack[l].astype(jnp.float32)
        h = jnp.where(h >= 0, h, 0.2 * h) * jnp.float32(SQRT2)
    return h.astype(x.dtype)


if __name__ == "__main__":
    num_layers = 4
    ws_feats = 32
    batch = 8

    key = jax.random.PRNGKey(0)
    kx, kw, kb = jax.random.split(key, 3)

    x = jax.random.normal(kx, (batch, ws_feats), dtype=jnp.float32)
    # PyTorch nn.Linear stores W as (out, in); we store W^T = (in, out) per layer so the kernel
    # computes x @ W^T directly.
    bound = 1.0 / (ws_feats ** 0.5)
    w_stack = jax.random.uniform(
        kw, (num_layers, ws_feats, ws_feats), minval=-bound, maxval=bound, dtype=jnp.float32
    )
    b_stack = jax.random.uniform(
        kb, (num_layers, ws_feats), minval=-bound, maxval=bound, dtype=jnp.float32
    )

    # 1) f32 weights, fused resident path (exact vs. the f32 reference).
    out_f32 = jax.block_until_ready(style_mapper(x, w_stack, b_stack))
    ref_f32 = reference_style_mapper(x, w_stack, b_stack)
    assert out_f32.shape == (batch, ws_feats)
    assert jnp.allclose(out_f32, ref_f32, atol=1e-5, rtol=1e-5), "f32 fused path mismatch"

    # 2) bf16 weights (MXU-native path); reference mirrors the same bf16-input/f32-accum matmuls.
    w_bf16 = w_stack.astype(jnp.bfloat16)
    out_bf16 = jax.block_until_ready(style_mapper(x, w_bf16, b_stack))
    ref_bf16 = reference_style_mapper(x, w_bf16, b_stack)
    assert jnp.allclose(out_bf16, ref_bf16, atol=1e-2, rtol=1e-2), "bf16 fused path mismatch"

    # 3) per-layer streaming fallback (used automatically when L*Fp^2 exceeds the VMEM budget).
    out_stream = jax.block_until_ready(style_mapper(x, w_stack, b_stack, force_stream=True))
    assert jnp.allclose(out_stream, ref_f32, atol=1e-5, rtol=1e-5), "streaming path mismatch"

    print("KERNEL_OK")
</pallas_src>

<mosaic_0001>
module attributes {stable_mosaic.version = 11 : i64} {
  func.func @_fused_kernel(%arg0: i32, %arg1: memref<8x128xf32, #tpu.memory_space<vmem>>, %arg2: memref<4x128x128xf32, #tpu.memory_space<vmem>>, %arg3: memref<4x1x128xf32, #tpu.memory_space<vmem>>, %arg4: memref<8x128xf32, #tpu.memory_space<vmem>>) attributes {dimension_semantics = [#tpu.dimension_semantics<parallel>], iteration_bounds = array<i64: 1>, scalar_prefetch = 0 : i64, scratch_operands = 0 : i64, tpu.core_type = #tpu.core_type<tc>, window_params = [{transform_indices = @transform_0, window_bounds = array<i64: 8, 128>}, {pipeline_mode = #tpu.pipeline_mode<synchronous>, transform_indices = @transform_1, window_bounds = array<i64: 4, 128, 128>}, {pipeline_mode = #tpu.pipeline_mode<synchronous>, transform_indices = @transform_2, window_bounds = array<i64: 4, 1, 128>}, {transform_indices = @transform_3, window_bounds = array<i64: 8, 128>}]} {
    %c0 = arith.constant 0 : index
    %c0_0 = arith.constant 0 : index
    %0 = vector.load %arg1[%c0, %c0_0] : memref<8x128xf32, #tpu.memory_space<vmem>>, vector<8x128xf32>
    %cst = arith.constant 1.41421354 : f32
    %cst_1 = arith.constant 0.282842726 : f32
    %c0_i32 = arith.constant 0 : i32
    %c4_i32 = arith.constant 4 : i32
    %1 = arith.addi %c0_i32, %c4_i32 : i32
    %c1_i32 = arith.constant 1 : i32
    %2 = scf.for %arg5 = %c0_i32 to %1 step %c1_i32 iter_args(%arg6 = %0) -> (vector<8x128xf32>)  : i32 {
      %4 = arith.index_cast %arg5 : i32 to index
      %c0_5 = arith.constant 0 : index
      %c0_6 = arith.constant 0 : index
      %5 = vector.load %arg2[%4, %c0_5, %c0_6] : memref<4x128x128xf32, #tpu.memory_space<vmem>>, vector<1x128x128xf32>
      %6 = vector.shape_cast %5 : vector<1x128x128xf32> to vector<128x128xf32>
      %cst_7 = arith.constant dense<0.000000e+00> : vector<8x128xf32>
      %7 = tpu.matmul %arg6, %6, %cst_7 {dimension_numbers = #tpu.dot_dimension_numbers<[1], [0], [0], [1], [0, 0, 1, 1], [], []>} : vector<8x128xf32>, vector<128x128xf32>, vector<8x128xf32> -> vector<8x128xf32>
      %8 = arith.index_cast %arg5 : i32 to index
      %c0_8 = arith.constant 0 : index
      %c0_9 = arith.constant 0 : index
      %9 = vector.load %arg3[%8, %c0_8, %c0_9] : memref<4x1x128xf32, #tpu.memory_space<vmem>>, vector<1x1x128xf32>
      %10 = vector.shape_cast %9 : vector<1x1x128xf32> to vector<1x128xf32>
      %11 = vector.broadcast %10 : vector<1x128xf32> to vector<8x128xf32>
      %12 = arith.addf %7, %11 : vector<8x128xf32>
      %cst_10 = arith.constant 0.000000e+00 : f32
      %13 = vector.broadcast %cst_10 : f32 to vector<8x128xf32>
      %14 = arith.cmpf oge, %12, %13 : vector<8x128xf32>
      %15 = vector.broadcast %cst : f32 to vector<8x128xf32>
      %16 = vector.broadcast %cst_1 : f32 to vector<8x128xf32>
      %17 = arith.select %14, %15, %16 : vector<8x128xi1>, vector<8x128xf32>
      %18 = arith.mulf %12, %17 : vector<8x128xf32>
      scf.yield %18 : vector<8x128xf32>
    }
    %c4_i32_2 = arith.constant 4 : i32
    %c0_3 = arith.constant 0 : index
    %c0_4 = arith.constant 0 : index
    %3 = vector.load %arg4[%c0_3, %c0_4] : memref<8x128xf32, #tpu.memory_space<vmem>>, vector<8x128xf32>
    tpu.vector_store %arg4[%c0_3, %c0_4], %2 {strides = array<i32>} : memref<8x128xf32, #tpu.memory_space<vmem>>, vector<8x128xf32>,
    return
  }
  func.func @transform_0(%arg0: i32) -> (i32, i32) {
    %c0_i32 = arith.constant 0 : i32
    %c0_i32_0 = arith.constant 0 : i32
    return %arg0, %c0_i32 : i32, i32
  }
  func.func @transform_1(%arg0: i32) -> (i32, i32, i32) {
    %c0_i32 = arith.constant 0 : i32
    %c0_i32_0 = arith.constant 0 : i32
    %c0_i32_1 = arith.constant 0 : i32
    %c0_i32_2 = arith.constant 0 : i32
    return %c0_i32, %c0_i32_0, %c0_i32_1 : i32, i32, i32
  }
  func.func @transform_2(%arg0: i32) -> (i32, i32, i32) {
    %c0_i32 = arith.constant 0 : i32
    %c0_i32_0 = arith.constant 0 : i32
    %c0_i32_1 = arith.constant 0 : i32
    %c0_i32_2 = arith.constant 0 : i32
    return %c0_i32, %c0_i32_0, %c0_i32_1 : i32, i32, i32
  }
  func.func @transform_3(%arg0: i32) -> (i32, i32) {
    %c0_i32 = arith.constant 0 : i32
    %c0_i32_0 = arith.constant 0 : i32
    return %arg0, %c0_i32 : i32, i32
  }
}

</mosaic_0001>

<llo_original>
// kernel: tpu_custom_call.1
$region0: #{tpu_custom_call.1}
  #allocation0 [shape = 'u32[]', space=smem, size = 0x4, offset = 0x4, fixed_abs, tag = 'smem constant byte address 0x4 - core index']
  #allocation1 [shape = 'u32[72,128]{1,0:T(1,128)}', space=vmem, size = 0x9000, scoped, tag = 'internal scratch']
  %s0 = inlined_call_operand.hbm [shape: f32[8,128], index: 0, kind: input, shape index: {}]
  %s1 = inlined_call_operand.hbm [shape: f32[4,128,128], index: 1, kind: input, shape index: {}]
  %s2 = inlined_call_operand.hbm [shape: f32[4,1,128], index: 2, kind: input, shape index: {}]
  %s3 = inlined_call_operand.hbm [shape: f32[8,128], index: 3, kind: output, shape index: {}]
  %s4 = sld [smem:[#allocation0]]
  $region41: #{tpu_custom_call.1} parent=0
    _
  %s6 = ssub.s32 1, %s4
  %s7 = scalar_select 0, %s6, %s4
  $region1: #{tpu_custom_call.1} parent=0
    #allocation2 [shape = 'u8[4096]{0}', space=vmem, size = 0x1000, scoped, tag = 'input window, operand 0, single buffered']
    #allocation3 [shape = 's32[1]{0}', space=sflag, size = 0x4, scoped, tag = 'scoped memory for tpu_custom_call.1']
    #allocation4 [shape = 's32[1]{0}', space=sflag, size = 0x4, scoped, tag = 'scoped memory for tpu_custom_call.1']
    #allocation5 [shape = 'u8[262144]{0}', space=vmem, size = 0x40000, scoped, tag = 'input window, operand 1, single buffered']
    #allocation6 [shape = 's32[1]{0}', space=sflag, size = 0x4, scoped, tag = 'scoped memory for tpu_custom_call.1']
    #allocation7 [shape = 'u8[2048]{0}', space=vmem, size = 0x800, scoped, tag = 'input window, operand 2, single buffered']
    #allocation8 [shape = 'u8[4096]{0}', space=vmem, size = 0x1000, scoped, tag = 'output window, operand 0, single buffered']
    %8 = vsyncpa [#allocation3], 0
    %9 = vsyncpa [#allocation6], 0
    %10 = vsyncpa [#allocation4], 0
    // Predicated region
    $region2: #{tpu_custom_call.1} parent=1 // pred_check
      _
    $region3: #{tpu_custom_call.1} parent=1 // pred_check_branch
      %12 = sbr.rel (0) target = $region5
    $region4: #{tpu_custom_call.1} parent=1 // pred_region
      %14 = vsyncadd [#allocation3], 0
      %s16 = sshll.u32 %s0, 4
      %s17 = int_to_ptr.hbm [resolvable:$true] %s16
      %s18 = sshll.u32 [#allocation2], 4
      %s19 = int_to_ptr.vmem [resolvable:$true] %s18
      %21 = dma.hbm_to_vmem [thread:$0]  %s17, 128, %s19, [#allocation3]
    $region5: #{tpu_custom_call.1} parent=1 // pred_fallthru
      _
    // Predicated region
    $region6: #{tpu_custom_call.1} parent=1 // pred_check
      _
    $region7: #{tpu_custom_call.1} parent=1 // pred_check_branch
      %23 = sbr.rel (0) target = $region9
    $region8: #{tpu_custom_call.1} parent=1 // pred_region
      %25 = vsyncadd [#allocation6], 0
      %s26 = sshll.u32 %s1, 4
      %s27 = int_to_ptr.hbm [resolvable:$true] %s26
      %s28 = sshll.u32 [#allocation5], 4
      %s29 = int_to_ptr.vmem [resolvable:$true] %s28
      %34 = dma.hbm_to_vmem [thread:$0]  %s27, 8192, %s29, [#allocation6], 128, 128, 8
    $region9: #{tpu_custom_call.1} parent=1 // pred_fallthru
      _
    // Predicated region
    $region10: #{tpu_custom_call.1} parent=1 // pred_check
      _
    $region11: #{tpu_custom_call.1} parent=1 // pred_check_branch
      %36 = sbr.rel (0) target = $region13
    $region12: #{tpu_custom_call.1} parent=1 // pred_region
      %38 = vsyncadd [#allocation6], 0
      %s39 = sshll.u32 %s2, 4
      %s40 = int_to_ptr.hbm [resolvable:$true] %s39
      %s41 = sshll.u32 [#allocation7], 4
      %s42 = int_to_ptr.vmem [resolvable:$true] %s41
      %47 = dma.hbm_to_vmem [thread:$0]  %s40, 64, %s42, [#allocation6], 16, 16, 1
    $region13: #{tpu_custom_call.1} parent=1 // pred_fallthru
      _
    // Predicated region
    $region14: #{tpu_custom_call.1} parent=1 // pred_check
      _
    $region15: #{tpu_custom_call.1} parent=1 // pred_check_branch
      %49 = sbr.rel (0) target = $region17
    $region16: #{tpu_custom_call.1} parent=1 // pred_region
      %51 = dma.done [#allocation3], 128
    $region17: #{tpu_custom_call.1} parent=1 // pred_fallthru
      _
    // Predicated region
    $region18: #{tpu_custom_call.1} parent=1 // pred_check
      _
    $region19: #{tpu_custom_call.1} parent=1 // pred_check_branch
      %53 = sbr.rel (0) target = $region21
    $region20: #{tpu_custom_call.1} parent=1 // pred_region
      %55 = dma.done [#allocation6], 8192
    $region21: #{tpu_custom_call.1} parent=1 // pred_fallthru
      _
    // Predicated region
    $region22: #{tpu_custom_call.1} parent=1 // pred_check
      _
    $region23: #{tpu_custom_call.1} parent=1 // pred_check_branch
      %57 = sbr.rel (0) target = $region25
    $region24: #{tpu_custom_call.1} parent=1 // pred_region
      %59 = dma.done [#allocation6], 64
    $region25: #{tpu_custom_call.1} parent=1 // pred_fallthru
      _
    %v60 = vld [vmem:[#allocation2] sm:$0xff]
    loop: start=0, step=1, limit=4
    $region26: #{tpu_custom_call.1} parent=1 // loop_pre_header
      _
    $region27: #{tpu_custom_call.1} parent=1 // loop_header
      %s62 = sphi 0, %s66
      %p63 = scmp.ge.s32.totalorder %s62, 4
      %v67 = vphi %v60, %v113
    $region28: #{tpu_custom_call.1} parent=1 // loop_header_branch
      %65 = sbr.rel (%p63) target = $region32
    $region29: #{tpu_custom_call.1} parent=1 // loop_body
      %s68 = smul.u32 %s62, 128
      %s69 = scalar_lea.vmem [#allocation5], %s68
      %v70 = vld [vmem:[%s69] sm:$0xff]
      %v71 = vld [vmem:[%s69 + $0x8] sm:$0xff]
      %v72 = vld [vmem:[%s69 + $0x10] sm:$0xff]
      %v73 = vld [vmem:[%s69 + $0x18] sm:$0xff]
      %v74 = vld [vmem:[%s69 + $0x20] sm:$0xff]
      %v75 = vld [vmem:[%s69 + $0x28] sm:$0xff]
      %v76 = vld [vmem:[%s69 + $0x30] sm:$0xff]
      %v77 = vld [vmem:[%s69 + $0x38] sm:$0xff]
      %v78 = vld [vmem:[%s69 + $0x40] sm:$0xff]
      %v79 = vld [vmem:[%s69 + $0x48] sm:$0xff]
      %v80 = vld [vmem:[%s69 + $0x50] sm:$0xff]
      %v81 = vld [vmem:[%s69 + $0x58] sm:$0xff]
      %v82 = vld [vmem:[%s69 + $0x60] sm:$0xff]
      %v83 = vld [vmem:[%s69 + $0x68] sm:$0xff]
      %v84 = vld [vmem:[%s69 + $0x70] sm:$0xff]
      %v85 = vld [vmem:[%s69 + $0x78] sm:$0xff]
      %s86 = scalar_lea.vmem [#allocation7], %s62
      %v87 = vld [vmem:[%s86] sm:$0x1]
      %v89 = vperm.slane %v87, 0
      %91 = vmatpush.msra.mxu0 %v85
      %92 = vmatpush.msra.mxu0 %v84
      %93 = vmatpush.msra.mxu0 %v83
      %94 = vmatpush.msra.mxu0 %v82
      %95 = vmatpush.msra.mxu0 %v81
      %96 = vmatpush.msra.mxu0 %v80
      %97 = vmatpush.msra.mxu0 %v79
      %98 = vmatpush.msra.mxu0 %v78
      %99 = vmatpush.msra.mxu0 %v77
      %100 = vmatpush.msra.mxu0 %v76
      %101 = vmatpush.msra.mxu0 %v75
      %102 = vmatpush.msra.mxu0 %v74
      %103 = vmatpush.msra.mxu0 %v73
      %104 = vmatpush.msra.mxu0 %v72
      %105 = vmatpush.msra.mxu0 %v71
      %106 = vmatpush.msra.mxu0 %v70
      %107 = vmatmul.f32.gmra.mxu0 %v67
      %v108 = vpop.f32.mrf.mxu0
      %v109 = vadd.f32 %v89, %v108
      %110 = vdwg.mxu0
      %vm111 = vcmp.ge.f32.partialorder %v109, 0.0
      %v112 = vsel %vm111, 1.4142135, 0.28284273
      %v113 = vmul.f32 %v109, %v112
    $region30: #{tpu_custom_call.1} parent=1 // loop_footer
      %s66 = sadd.s32 1, %s62
    $region31: #{tpu_custom_call.1} parent=1 // loop_footer_branch
      %61 = sbr.rel target = $region27
    $region32: #{tpu_custom_call.1} parent=1 // loop_exit
      _
    %114 = vst [vmem:[#allocation8] sm:$0xff] %v67
    // Predicated region
    $region33: #{tpu_custom_call.1} parent=1 // pred_check
      _
    $region34: #{tpu_custom_call.1} parent=1 // pred_check_branch
      %116 = sbr.rel (0) target = $region36
    $region35: #{tpu_custom_call.1} parent=1 // pred_region
      %118 = vsyncadd [#allocation4], 0
      %s120 = sshll.u32 [#allocation8], 4
      %s121 = int_to_ptr.vmem [resolvable:$true] %s120
      %s122 = sshll.u32 %s3, 4
      %s123 = int_to_ptr.hbm [resolvable:$true] %s122
      %125 = dma.vmem_to_hbm [thread:$0]  %s121, 128, %s123, [#allocation4]
    $region36: #{tpu_custom_call.1} parent=1 // pred_fallthru
      _
    // Predicated region
    $region37: #{tpu_custom_call.1} parent=1 // pred_check
      _
    $region38: #{tpu_custom_call.1} parent=1 // pred_check_branch
      %127 = sbr.rel (0) target = $region40
    $region39: #{tpu_custom_call.1} parent=1 // pred_region
      %129 = dma.done [#allocation4], 128
    $region40: #{tpu_custom_call.1} parent=1 // pred_fallthru
      _
    %130 = vsyncpa [#allocation3], 1
    %131 = vsyncpa [#allocation6], 1
    %132 = vsyncpa [#allocation4], 1

</llo_original>
